<compile_context>
chip_gen: v5e
topology: v5e:2x2
jax: 0.10.0
libtpu: 0.0.40
codegen_flags: <defaults>
</compile_context>

<pallas_src>
import functools
import math

import jax
import jax.numpy as jnp
from jax import lax
from jax.experimental import pallas as pl
from jax.experimental.pallas import tpu as pltpu


def _flash_attn_kernel(xq_ref, xkv_ref, wqT_ref, wkvT_ref, o_ref,
                       q_sc, m_sc, l_sc, acc_sc, *, scale):
    """One (query-tile, kv-tile) grid step of fused projection + attention.

    xq_ref  : [TQ, Dp]  token encodings for this query tile
    xkv_ref : [TK, Dp]  token encodings for this key/value tile
    wqT_ref : [Dp, Dp]  pre-transposed (and zero-padded) W_q
    wkvT_ref: [Dp, 2Dp] pre-transposed [W_k | W_v], fused
    o_ref   : [TQ, Dp]  attention output tile (written on last kv step)
    """
    ki = pl.program_id(1)
    Dp = xkv_ref.shape[-1]
    in_dt = xkv_ref.dtype

    @pl.when(ki == 0)
    def _init():
        # Project the query tile once per query tile; fold 1/sqrt(d_model)
        # into q so the S x S scores never get rescaled on the VALU.
        q_sc[...] = jnp.dot(xq_ref[...], wqT_ref[...],
                            preferred_element_type=jnp.float32) * scale
        m_sc[...] = jnp.full(m_sc.shape, -jnp.inf, m_sc.dtype)
        l_sc[...] = jnp.zeros(l_sc.shape, l_sc.dtype)
        acc_sc[...] = jnp.zeros(acc_sc.shape, acc_sc.dtype)

    # Fused K/V projection of the current kv tile: one MXU pass -> [TK, 2*Dp].
    kv = jnp.dot(xkv_ref[...], wkvT_ref[...],
                 preferred_element_type=jnp.float32)
    k = kv[:, :Dp].astype(in_dt)
    v = kv[:, Dp:].astype(in_dt)

    # scores = q @ k^T without materializing a transpose: contract last dims.
    s = lax.dot_general(q_sc[...].astype(in_dt), k,
                        (((1,), (1,)), ((), ())),
                        preferred_element_type=jnp.float32)      # [TQ, TK]

    # Online (flash) softmax update; statistics stay in f32.
    m_new = jnp.maximum(m_sc[...], jnp.max(s, axis=-1, keepdims=True))
    alpha = jnp.exp(m_sc[...] - m_new)
    p = jnp.exp(s - m_new)                                        # [TQ, TK]
    l_sc[...] = alpha * l_sc[...] + jnp.sum(p, axis=-1, keepdims=True)
    acc_sc[...] = alpha * acc_sc[...] + jnp.dot(
        p.astype(in_dt), v, preferred_element_type=jnp.float32)
    m_sc[...] = m_new

    @pl.when(ki == pl.num_programs(1) - 1)
    def _finalize():
        o_ref[...] = (acc_sc[...] *
                      pl.reciprocal(l_sc[...], approx=True)).astype(o_ref.dtype)


def _pick_tile(s):
    """Largest 8-aligned tile that evenly divides the sequence length."""
    for t in (512, 256, 128, 64, 32, 16, 8):
        if s % t == 0:
            return t
    return s  # block == full dim is always legal


def self_attention(token_encodings, w_q, w_k, w_v):
    """token_encodings: [S, D]; w_q/w_k/w_v: [D, D] nn.Linear weights (out, in)."""
    S, D = token_encodings.shape
    assert w_q.shape == (D, D) and w_k.shape == (D, D) and w_v.shape == (D, D)
    dt = token_encodings.dtype

    # Lane-dense padding of the model dim to a multiple of 128.
    Dp = max(128, ((D + 127) // 128) * 128)

    # Pre-transpose weights once in the wrapper (layout plumbing, free) and
    # zero-pad them into lane-dense slabs.  K/V weights are fused side by side.
    wqT = jnp.zeros((Dp, Dp), dt).at[:D, :D].set(w_q.T.astype(dt))
    wkvT = jnp.zeros((Dp, 2 * Dp), dt)
    wkvT = wkvT.at[:D, :D].set(w_k.T.astype(dt))
    wkvT = wkvT.at[:D, Dp:Dp + D].set(w_v.T.astype(dt))

    x = token_encodings
    if Dp != D:
        x = jnp.pad(x, ((0, 0), (0, Dp - D)))

    tq = _pick_tile(S)
    tk = _pick_tile(S)
    nq, nk = S // tq, S // tk

    # PyTorch scales by sqrt(k.size(col_dim)) == sqrt(d_model) (the *unpadded* D).
    scale = 1.0 / math.sqrt(D)
    kernel = functools.partial(_flash_attn_kernel, scale=scale)

    out = pl.pallas_call(
        kernel,
        out_shape=jax.ShapeDtypeStruct((S, Dp), dt),
        grid_spec=pltpu.PrefetchScalarGridSpec(
            num_scalar_prefetch=0,
            grid=(nq, nk),                       # reduction (kv) axis last
            in_specs=[
                pl.BlockSpec((tq, Dp), lambda qi, ki: (qi, 0)),      # x (q tile)
                pl.BlockSpec((tk, Dp), lambda qi, ki: (ki, 0)),      # x (kv tile)
                pl.BlockSpec((Dp, Dp), lambda qi, ki: (0, 0)),       # W_q^T resident
                pl.BlockSpec((Dp, 2 * Dp), lambda qi, ki: (0, 0)),   # [W_k|W_v]^T resident
            ],
            out_specs=pl.BlockSpec((tq, Dp), lambda qi, ki: (qi, 0)),
            scratch_shapes=[
                pltpu.VMEM((tq, Dp), jnp.float32),  # q tile (scaled)
                pltpu.VMEM((tq, 1), jnp.float32),   # running max
                pltpu.VMEM((tq, 1), jnp.float32),   # running denom
                pltpu.VMEM((tq, Dp), jnp.float32),  # output accumulator
            ],
        ),
        compiler_params=pltpu.CompilerParams(
            dimension_semantics=("parallel", "arbitrary")),
    )(x, x, wqT, wkvT)

    return out[:, :D]


def _reference(token_encodings, w_q, w_k, w_v):
    """Pure-JAX reference mirroring the PyTorch forward pass."""
    x = token_encodings.astype(jnp.float32)
    q = x @ w_q.T
    k = x @ w_k.T
    v = x @ w_v.T
    sims = q @ k.T
    scaled = sims / jnp.sqrt(jnp.float32(k.shape[1]))
    attn = jax.nn.softmax(scaled, axis=1)
    return attn @ v


if __name__ == "__main__":
    # Small shapes consistent with the module: seq=8 tokens, d_model=32.
    SEQ, D_MODEL = 8, 32

    key = jax.random.PRNGKey(0)
    k_x, k_q, k_k, k_v = jax.random.split(key, 4)

    token_encodings = jax.random.normal(k_x, (SEQ, D_MODEL), dtype=jnp.float32)
    # Deterministic nn.Linear-style weights, shape (out_features, in_features).
    bound = 1.0 / (D_MODEL ** 0.5)
    w_q = jax.random.uniform(k_q, (D_MODEL, D_MODEL), jnp.float32, -bound, bound)
    w_k = jax.random.uniform(k_k, (D_MODEL, D_MODEL), jnp.float32, -bound, bound)
    w_v = jax.random.uniform(k_v, (D_MODEL, D_MODEL), jnp.float32, -bound, bound)

    out = self_attention(token_encodings, w_q, w_k, w_v)
    out = jax.block_until_ready(out)

    ref = _reference(token_encodings, w_q, w_k, w_v)
    assert out.shape == (SEQ, D_MODEL)
    # Tolerance loosened slightly vs 1e-5 because the softmax denominator uses
    # the EUP approximate reciprocal (pl.reciprocal(approx=True)).
    assert jnp.allclose(out, ref, atol=1e-3, rtol=1e-3), (
        float(jnp.max(jnp.abs(out - ref))))

    print("KERNEL_OK")
</pallas_src>

<mosaic_0001>
module attributes {stable_mosaic.version = 11 : i64} {
  func.func @_flash_attn_kernel(%arg0: i32, %arg1: i32, %arg2: memref<8x128xf32, #tpu.memory_space<vmem>>, %arg3: memref<8x128xf32, #tpu.memory_space<vmem>>, %arg4: memref<128x128xf32, #tpu.memory_space<vmem>>, %arg5: memref<128x256xf32, #tpu.memory_space<vmem>>, %arg6: memref<8x128xf32, #tpu.memory_space<vmem>>, %arg7: memref<8x128xf32, #tpu.memory_space<vmem>>, %arg8: memref<8x1xf32, #tpu.memory_space<vmem>>, %arg9: memref<8x1xf32, #tpu.memory_space<vmem>>, %arg10: memref<8x128xf32, #tpu.memory_space<vmem>>) attributes {dimension_semantics = [#tpu.dimension_semantics<parallel>, #tpu.dimension_semantics<arbitrary>], iteration_bounds = array<i64: 1, 1>, scalar_prefetch = 0 : i64, scratch_operands = 4 : i64, tpu.core_type = #tpu.core_type<tc>, window_params = [{transform_indices = @transform_0, window_bounds = array<i64: 8, 128>}, {transform_indices = @transform_1, window_bounds = array<i64: 8, 128>}, {pipeline_mode = #tpu.pipeline_mode<synchronous>, transform_indices = @transform_2, window_bounds = array<i64: 128, 128>}, {pipeline_mode = #tpu.pipeline_mode<synchronous>, transform_indices = @transform_3, window_bounds = array<i64: 128, 256>}, {transform_indices = @transform_4, window_bounds = array<i64: 8, 128>}]} {
    %c0_i32 = arith.constant 0 : i32
    %0 = arith.cmpi eq, %arg1, %c0_i32 : i32
    %1 = arith.extui %0 : i1 to i32
    %c0_i32_0 = arith.constant 0 : i32
    %2 = arith.cmpi ne, %1, %c0_i32_0 : i32
    scf.if %2 {
      %c0_26 = arith.constant 0 : index
      %c0_27 = arith.constant 0 : index
      %36 = vector.load %arg2[%c0_26, %c0_27] : memref<8x128xf32, #tpu.memory_space<vmem>>, vector<8x128xf32>
      %c0_28 = arith.constant 0 : index
      %c0_29 = arith.constant 0 : index
      %37 = vector.load %arg4[%c0_28, %c0_29] : memref<128x128xf32, #tpu.memory_space<vmem>>, vector<128x128xf32>
      %cst_30 = arith.constant dense<0.000000e+00> : vector<8x128xf32>
      %38 = tpu.matmul %36, %37, %cst_30 {dimension_numbers = #tpu.dot_dimension_numbers<[1], [0], [0], [1], [0, 0, 1, 1], [], []>} : vector<8x128xf32>, vector<128x128xf32>, vector<8x128xf32> -> vector<8x128xf32>
      %cst_31 = arith.constant 0.176776692 : f32
      %39 = vector.broadcast %cst_31 : f32 to vector<8x128xf32>
      %40 = arith.mulf %38, %39 : vector<8x128xf32>
      %c0_32 = arith.constant 0 : index
      %c0_33 = arith.constant 0 : index
      %41 = vector.load %arg7[%c0_32, %c0_33] : memref<8x128xf32, #tpu.memory_space<vmem>>, vector<8x128xf32>
      tpu.vector_store %arg7[%c0_32, %c0_33], %40 {strides = array<i32>} : memref<8x128xf32, #tpu.memory_space<vmem>>, vector<8x128xf32>,
      %cst_34 = arith.constant 0xFF800000 : f32
      %42 = vector.broadcast %cst_34 : f32 to vector<8x1xf32>
      %c0_35 = arith.constant 0 : index
      %c0_36 = arith.constant 0 : index
      %43 = vector.load %arg8[%c0_35, %c0_36] : memref<8x1xf32, #tpu.memory_space<vmem>>, vector<8x1xf32>
      tpu.vector_store %arg8[%c0_35, %c0_36], %42 {strides = array<i32>} : memref<8x1xf32, #tpu.memory_space<vmem>>, vector<8x1xf32>,
      %cst_37 = arith.constant 0.000000e+00 : f32
      %44 = vector.broadcast %cst_37 : f32 to vector<8x1xf32>
      %c0_38 = arith.constant 0 : index
      %c0_39 = arith.constant 0 : index
      %45 = vector.load %arg9[%c0_38, %c0_39] : memref<8x1xf32, #tpu.memory_space<vmem>>, vector<8x1xf32>
      tpu.vector_store %arg9[%c0_38, %c0_39], %44 {strides = array<i32>} : memref<8x1xf32, #tpu.memory_space<vmem>>, vector<8x1xf32>,
      %cst_40 = arith.constant 0.000000e+00 : f32
      %46 = vector.broadcast %cst_40 : f32 to vector<8x128xf32>
      %c0_41 = arith.constant 0 : index
      %c0_42 = arith.constant 0 : index
      %47 = vector.load %arg10[%c0_41, %c0_42] : memref<8x128xf32, #tpu.memory_space<vmem>>, vector<8x128xf32>
      tpu.vector_store %arg10[%c0_41, %c0_42], %46 {strides = array<i32>} : memref<8x128xf32, #tpu.memory_space<vmem>>, vector<8x128xf32>,
    } else {
    }
    %c0 = arith.constant 0 : index
    %c0_1 = arith.constant 0 : index
    %3 = vector.load %arg3[%c0, %c0_1] : memref<8x128xf32, #tpu.memory_space<vmem>>, vector<8x128xf32>
    %c0_2 = arith.constant 0 : index
    %c0_3 = arith.constant 0 : index
    %4 = vector.load %arg5[%c0_2, %c0_3] : memref<128x256xf32, #tpu.memory_space<vmem>>, vector<128x256xf32>
    %cst = arith.constant dense<0.000000e+00> : vector<8x256xf32>
    %5 = tpu.matmul %3, %4, %cst {dimension_numbers = #tpu.dot_dimension_numbers<[1], [0], [0], [1], [0, 0, 1, 1], [], []>} : vector<8x128xf32>, vector<128x256xf32>, vector<8x256xf32> -> vector<8x256xf32>
    %6 = vector.extract_strided_slice %5 {offsets = [0, 0], sizes = [8, 128], strides = [1, 1]} : vector<8x256xf32> to vector<8x128xf32>
    %7 = vector.extract_strided_slice %5 {offsets = [0, 128], sizes = [8, 128], strides = [1, 1]} : vector<8x256xf32> to vector<8x128xf32>
    %c0_4 = arith.constant 0 : index
    %c0_5 = arith.constant 0 : index
    %8 = vector.load %arg7[%c0_4, %c0_5] : memref<8x128xf32, #tpu.memory_space<vmem>>, vector<8x128xf32>
    %cst_6 = arith.constant dense<0.000000e+00> : vector<8x8xf32>
    %9 = tpu.matmul %8, %6, %cst_6 {dimension_numbers = #tpu.dot_dimension_numbers<[1], [1], [0], [0], [0, 0, 1, 0], [], []>} : vector<8x128xf32>, vector<8x128xf32>, vector<8x8xf32> -> vector<8x8xf32>
    %c0_7 = arith.constant 0 : index
    %c0_8 = arith.constant 0 : index
    %10 = vector.load %arg8[%c0_7, %c0_8] : memref<8x1xf32, #tpu.memory_space<vmem>>, vector<8x1xf32>
    %cst_9 = arith.constant dense<0xFF800000> : vector<8xf32>
    %11 = vector.multi_reduction <maximumf>, %9, %cst_9 [1] : vector<8x8xf32> to vector<8xf32>
    %12 = vector.shape_cast %11 : vector<8xf32> to vector<8x1xf32>
    %13 = arith.maximumf %10, %12 : vector<8x1xf32>
    %c0_10 = arith.constant 0 : index
    %c0_11 = arith.constant 0 : index
    %14 = vector.load %arg8[%c0_10, %c0_11] : memref<8x1xf32, #tpu.memory_space<vmem>>, vector<8x1xf32>
    %15 = arith.subf %14, %13 : vector<8x1xf32>
    %16 = math.exp %15 : vector<8x1xf32>
    %17 = vector.broadcast %13 : vector<8x1xf32> to vector<8x8xf32>
    %18 = arith.subf %9, %17 : vector<8x8xf32>
    %19 = math.exp %18 : vector<8x8xf32>
    %c0_12 = arith.constant 0 : index
    %c0_13 = arith.constant 0 : index
    %20 = vector.load %arg9[%c0_12, %c0_13] : memref<8x1xf32, #tpu.memory_space<vmem>>, vector<8x1xf32>
    %21 = arith.mulf %16, %20 : vector<8x1xf32>
    %cst_14 = arith.constant dense<0.000000e+00> : vector<8xf32>
    %22 = vector.multi_reduction <add>, %19, %cst_14 [1] : vector<8x8xf32> to vector<8xf32>
    %23 = vector.shape_cast %22 : vector<8xf32> to vector<8x1xf32>
    %24 = arith.addf %21, %23 : vector<8x1xf32>
    %c0_15 = arith.constant 0 : index
    %c0_16 = arith.constant 0 : index
    %25 = vector.load %arg9[%c0_15, %c0_16] : memref<8x1xf32, #tpu.memory_space<vmem>>, vector<8x1xf32>
    tpu.vector_store %arg9[%c0_15, %c0_16], %24 {strides = array<i32>} : memref<8x1xf32, #tpu.memory_space<vmem>>, vector<8x1xf32>,
    %c0_17 = arith.constant 0 : index
    %c0_18 = arith.constant 0 : index
    %26 = vector.load %arg10[%c0_17, %c0_18] : memref<8x128xf32, #tpu.memory_space<vmem>>, vector<8x128xf32>
    %27 = vector.broadcast %16 : vector<8x1xf32> to vector<8x128xf32>
    %28 = arith.mulf %27, %26 : vector<8x128xf32>
    %cst_19 = arith.constant dense<0.000000e+00> : vector<8x128xf32>
    %29 = tpu.matmul %19, %7, %cst_19 {dimension_numbers = #tpu.dot_dimension_numbers<[1], [0], [0], [1], [0, 0, 1, 1], [], []>} : vector<8x8xf32>, vector<8x128xf32>, vector<8x128xf32> -> vector<8x128xf32>
    %30 = arith.addf %28, %29 : vector<8x128xf32>
    %c0_20 = arith.constant 0 : index
    %c0_21 = arith.constant 0 : index
    %31 = vector.load %arg10[%c0_20, %c0_21] : memref<8x128xf32, #tpu.memory_space<vmem>>, vector<8x128xf32>
    tpu.vector_store %arg10[%c0_20, %c0_21], %30 {strides = array<i32>} : memref<8x128xf32, #tpu.memory_space<vmem>>, vector<8x128xf32>,
    %c0_22 = arith.constant 0 : index
    %c0_23 = arith.constant 0 : index
    %32 = vector.load %arg8[%c0_22, %c0_23] : memref<8x1xf32, #tpu.memory_space<vmem>>, vector<8x1xf32>
    tpu.vector_store %arg8[%c0_22, %c0_23], %13 {strides = array<i32>} : memref<8x1xf32, #tpu.memory_space<vmem>>, vector<8x1xf32>,
    %c0_i32_24 = arith.constant 0 : i32
    %33 = arith.cmpi eq, %arg1, %c0_i32_24 : i32
    %34 = arith.extui %33 : i1 to i32
    %c0_i32_25 = arith.constant 0 : i32
    %35 = arith.cmpi ne, %34, %c0_i32_25 : i32
    scf.if %35 {
      %c0_26 = arith.constant 0 : index
      %c0_27 = arith.constant 0 : index
      %36 = vector.load %arg10[%c0_26, %c0_27] : memref<8x128xf32, #tpu.memory_space<vmem>>, vector<8x128xf32>
      %c0_28 = arith.constant 0 : index
      %c0_29 = arith.constant 0 : index
      %37 = vector.load %arg9[%c0_28, %c0_29] : memref<8x1xf32, #tpu.memory_space<vmem>>, vector<8x1xf32>
      %38 = tpu.reciprocal %37 {approx = true} : vector<8x1xf32> -> vector<8x1xf32>
      %39 = vector.broadcast %38 : vector<8x1xf32> to vector<8x128xf32>
      %40 = arith.mulf %36, %39 : vector<8x128xf32>
      %c0_30 = arith.constant 0 : index
      %c0_31 = arith.constant 0 : index
      %41 = vector.load %arg6[%c0_30, %c0_31] : memref<8x128xf32, #tpu.memory_space<vmem>>, vector<8x128xf32>
      tpu.vector_store %arg6[%c0_30, %c0_31], %40 {strides = array<i32>} : memref<8x128xf32, #tpu.memory_space<vmem>>, vector<8x128xf32>,
    } else {
    }
    return
  }
  func.func @transform_0(%arg0: i32, %arg1: i32) -> (i32, i32) {
    %c0_i32 = arith.constant 0 : i32
    %c0_i32_0 = arith.constant 0 : i32
    return %arg0, %c0_i32 : i32, i32
  }
  func.func @transform_1(%arg0: i32, %arg1: i32) -> (i32, i32) {
    %c0_i32 = arith.constant 0 : i32
    %c0_i32_0 = arith.constant 0 : i32
    return %arg1, %c0_i32 : i32, i32
  }
  func.func @transform_2(%arg0: i32, %arg1: i32) -> (i32, i32) {
    %c0_i32 = arith.constant 0 : i32
    %c0_i32_0 = arith.constant 0 : i32
    %c0_i32_1 = arith.constant 0 : i32
    return %c0_i32, %c0_i32_0 : i32, i32
  }
  func.func @transform_3(%arg0: i32, %arg1: i32) -> (i32, i32) {
    %c0_i32 = arith.constant 0 : i32
    %c0_i32_0 = arith.constant 0 : i32
    %c0_i32_1 = arith.constant 0 : i32
    return %c0_i32, %c0_i32_0 : i32, i32
  }
  func.func @transform_4(%arg0: i32, %arg1: i32) -> (i32, i32) {
    %c0_i32 = arith.constant 0 : i32
    %c0_i32_0 = arith.constant 0 : i32
    return %arg0, %c0_i32 : i32, i32
  }
}

</mosaic_0001>

<llo_original>
// kernel: tpu_custom_call.1
$region0: #{tpu_custom_call.1}
  #allocation0 [shape = 'u32[]', space=smem, size = 0x4, offset = 0x4, fixed_abs, tag = 'smem constant byte address 0x4 - core index']
  #allocation1 [shape = 'u32[72,128]{1,0:T(1,128)}', space=vmem, size = 0x9000, scoped, tag = 'internal scratch']
  #allocation2 [shape = 'f32[8,128]{1,0:T(8,128)}', space=vmem, size = 0x1000, scoped, tag = 'scratch operand']
  #allocation3 [shape = 'f32[8,1]{1,0:T(8,128)}', space=vmem, size = 0x1000, scoped, tag = 'scratch operand']
  #allocation4 [shape = 'f32[8,1]{1,0:T(8,128)}', space=vmem, size = 0x1000, scoped, tag = 'scratch operand']
  #allocation5 [shape = 'f32[8,128]{1,0:T(8,128)}', space=vmem, size = 0x1000, scoped, tag = 'scratch operand']
  %s0 = inlined_call_operand.hbm [shape: f32[8,128], index: 0, kind: input, shape index: {}]
  %s1 = inlined_call_operand.hbm [shape: f32[8,128], index: 1, kind: input, shape index: {}]
  %s2 = inlined_call_operand.hbm [shape: f32[128,128], index: 2, kind: input, shape index: {}]
  %s3 = inlined_call_operand.hbm [shape: f32[128,256], index: 3, kind: input, shape index: {}]
  %s4 = inlined_call_operand.hbm [shape: f32[8,128], index: 4, kind: output, shape index: {}]
  %s5 = sld [smem:[#allocation0]]
  $region50: #{tpu_custom_call.1} parent=0
    _
  %s7 = ssub.s32 1, %s5
  %s8 = scalar_select 0, %s7, %s5
  $region1: #{tpu_custom_call.1} parent=0
    #allocation6 [shape = 'u8[4096]{0}', space=vmem, size = 0x1000, scoped, tag = 'input window, operand 0, single buffered']
    #allocation7 [shape = 's32[1]{0}', space=sflag, size = 0x4, scoped, tag = 'scoped memory for tpu_custom_call.1']
    #allocation8 [shape = 's32[1]{0}', space=sflag, size = 0x4, scoped, tag = 'scoped memory for tpu_custom_call.1']
    #allocation9 [shape = 'u8[4096]{0}', space=vmem, size = 0x1000, scoped, tag = 'input window, operand 1, single buffered']
    #allocation10 [shape = 's32[1]{0}', space=sflag, size = 0x4, scoped, tag = 'scoped memory for tpu_custom_call.1']
    #allocation11 [shape = 'u8[65536]{0}', space=vmem, size = 0x10000, scoped, tag = 'input window, operand 2, single buffered']
    #allocation12 [shape = 'u8[131072]{0}', space=vmem, size = 0x20000, scoped, tag = 'input window, operand 3, single buffered']
    #allocation13 [shape = 's32[1]{0}', space=sflag, size = 0x4, scoped, tag = 'scoped memory for tpu_custom_call.1']
    #allocation14 [shape = 'u8[4096]{0}', space=vmem, size = 0x1000, scoped, tag = 'output window, operand 0, single buffered']
    %9 = vsyncpa [#allocation7], 0
    %10 = vsyncpa [#allocation10], 0
    %11 = vsyncpa [#allocation13], 0
    %12 = vsyncpa [#allocation8], 0
    // Predicated region
    $region2: #{tpu_custom_call.1} parent=1 // pred_check
      _
    $region3: #{tpu_custom_call.1} parent=1 // pred_check_branch
      %14 = sbr.rel (0) target = $region5
    $region4: #{tpu_custom_call.1} parent=1 // pred_region
      %16 = vsyncadd [#allocation7], 0
      %s18 = sshll.u32 %s0, 4
      %s19 = int_to_ptr.hbm [resolvable:$true] %s18
      %s20 = sshll.u32 [#allocation6], 4
      %s21 = int_to_ptr.vmem [resolvable:$true] %s20
      %23 = dma.hbm_to_vmem [thread:$0]  %s19, 128, %s21, [#allocation7]
    $region5: #{tpu_custom_call.1} parent=1 // pred_fallthru
      _
    // Predicated region
    $region6: #{tpu_custom_call.1} parent=1 // pred_check
      _
    $region7: #{tpu_custom_call.1} parent=1 // pred_check_branch
      %25 = sbr.rel (0) target = $region9
    $region8: #{tpu_custom_call.1} parent=1 // pred_region
      %27 = vsyncadd [#allocation10], 0
      %s29 = sshll.u32 %s1, 4
      %s30 = int_to_ptr.hbm [resolvable:$true] %s29
      %s31 = sshll.u32 [#allocation9], 4
      %s32 = int_to_ptr.vmem [resolvable:$true] %s31
      %34 = dma.hbm_to_vmem [thread:$0]  %s30, 128, %s32, [#allocation10]
    $region9: #{tpu_custom_call.1} parent=1 // pred_fallthru
      _
    // Predicated region
    $region10: #{tpu_custom_call.1} parent=1 // pred_check
      _
    $region11: #{tpu_custom_call.1} parent=1 // pred_check_branch
      %36 = sbr.rel (0) target = $region13
    $region12: #{tpu_custom_call.1} parent=1 // pred_region
      %38 = vsyncadd [#allocation10], 0
      %s39 = sshll.u32 %s2, 4
      %s40 = int_to_ptr.hbm [resolvable:$true] %s39
      %s41 = sshll.u32 [#allocation11], 4
      %s42 = int_to_ptr.vmem [resolvable:$true] %s41
      %47 = dma.hbm_to_vmem [thread:$0]  %s40, 2048, %s42, [#allocation10], 128, 128, 8
    $region13: #{tpu_custom_call.1} parent=1 // pred_fallthru
      _
    // Predicated region
    $region14: #{tpu_custom_call.1} parent=1 // pred_check
      _
    $region15: #{tpu_custom_call.1} parent=1 // pred_check_branch
      %49 = sbr.rel (0) target = $region17
    $region16: #{tpu_custom_call.1} parent=1 // pred_region
      %51 = vsyncadd [#allocation13], 0
      %s52 = sshll.u32 %s3, 4
      %s53 = int_to_ptr.hbm [resolvable:$true] %s52
      %s54 = sshll.u32 [#allocation12], 4
      %s55 = int_to_ptr.vmem [resolvable:$true] %s54
      %60 = dma.hbm_to_vmem [thread:$0]  %s53, 4096, %s55, [#allocation13], 256, 256, 16
    $region17: #{tpu_custom_call.1} parent=1 // pred_fallthru
      _
    // Predicated region
    $region18: #{tpu_custom_call.1} parent=1 // pred_check
      _
    $region19: #{tpu_custom_call.1} parent=1 // pred_check_branch
      %62 = sbr.rel (0) target = $region21
    $region20: #{tpu_custom_call.1} parent=1 // pred_region
      %64 = dma.done [#allocation7], 128
    $region21: #{tpu_custom_call.1} parent=1 // pred_fallthru
      _
    // Predicated region
    $region22: #{tpu_custom_call.1} parent=1 // pred_check
      _
    $region23: #{tpu_custom_call.1} parent=1 // pred_check_branch
      %66 = sbr.rel (0) target = $region25
    $region24: #{tpu_custom_call.1} parent=1 // pred_region
      %68 = dma.done [#allocation10], 128
    $region25: #{tpu_custom_call.1} parent=1 // pred_fallthru
      _
    // Predicated region
    $region26: #{tpu_custom_call.1} parent=1 // pred_check
      _
    $region27: #{tpu_custom_call.1} parent=1 // pred_check_branch
      %70 = sbr.rel (0) target = $region29
    $region28: #{tpu_custom_call.1} parent=1 // pred_region
      %72 = dma.done [#allocation10], 2048
    $region29: #{tpu_custom_call.1} parent=1 // pred_fallthru
      _
    // Predicated region
    $region30: #{tpu_custom_call.1} parent=1 // pred_check
      _
    $region31: #{tpu_custom_call.1} parent=1 // pred_check_branch
      %74 = sbr.rel (0) target = $region33
    $region32: #{tpu_custom_call.1} parent=1 // pred_region
      %76 = dma.done [#allocation13], 4096
    $region33: #{tpu_custom_call.1} parent=1 // pred_fallthru
      _
    %p77 = scmp.eq.s32.totalorder 0, 0
    // Predicated region
    $region34: #{tpu_custom_call.1} parent=1 // pred_check
      %p78 = pneg %p77
    $region35: #{tpu_custom_call.1} parent=1 // pred_check_branch
      %80 = sbr.rel (%p78) target = $region37
    $region36: #{tpu_custom_call.1} parent=1 // pred_region
      %v81 = vld [vmem:[#allocation6] sm:$0xff]
      %v82 = vld [vmem:[#allocation11] sm:$0xff]
      %v83 = vld [vmem:[#allocation11 + $0x8] sm:$0xff]
      %v84 = vld [vmem:[#allocation11 + $0x10] sm:$0xff]
      %v85 = vld [vmem:[#allocation11 + $0x18] sm:$0xff]
      %v86 = vld [vmem:[#allocation11 + $0x20] sm:$0xff]
      %v87 = vld [vmem:[#allocation11 + $0x28] sm:$0xff]
      %v88 = vld [vmem:[#allocation11 + $0x30] sm:$0xff]
      %v89 = vld [vmem:[#allocation11 + $0x38] sm:$0xff]
      %v90 = vld [vmem:[#allocation11 + $0x40] sm:$0xff]
      %v91 = vld [vmem:[#allocation11 + $0x48] sm:$0xff]
      %v92 = vld [vmem:[#allocation11 + $0x50] sm:$0xff]
      %v93 = vld [vmem:[#allocation11 + $0x58] sm:$0xff]
      %v94 = vld [vmem:[#allocation11 + $0x60] sm:$0xff]
      %v95 = vld [vmem:[#allocation11 + $0x68] sm:$0xff]
      %v96 = vld [vmem:[#allocation11 + $0x70] sm:$0xff]
      %v97 = vld [vmem:[#allocation11 + $0x78] sm:$0xff]
      %98 = vmatpush.msra.mxu0 %v97
      %99 = vmatpush.msra.mxu0 %v96
      %100 = vmatpush.msra.mxu0 %v95
      %101 = vmatpush.msra.mxu0 %v94
      %102 = vmatpush.msra.mxu0 %v93
      %103 = vmatpush.msra.mxu0 %v92
      %104 = vmatpush.msra.mxu0 %v91
      %105 = vmatpush.msra.mxu0 %v90
      %106 = vmatpush.msra.mxu0 %v89
      %107 = vmatpush.msra.mxu0 %v88
      %108 = vmatpush.msra.mxu0 %v87
      %109 = vmatpush.msra.mxu0 %v86
      %110 = vmatpush.msra.mxu0 %v85
      %111 = vmatpush.msra.mxu0 %v84
      %112 = vmatpush.msra.mxu0 %v83
      %113 = vmatpush.msra.mxu0 %v82
      %114 = vmatmul.f32.gmra.mxu0 %v81
      %v115 = vpop.f32.mrf.mxu0
      %v116 = vadd.f32 0.0, %v115
      %117 = vdwg.mxu0
      %v118 = vmul.f32 %v116, 0.17677669
      %119 = vst [vmem:[#allocation2] sm:$0xff] %v118
      %vm120 = vcmask 7168
      %121 = vst.msk [vmem:[#allocation3] sm:$0xff] %vm120, -inf
      %122 = vst.msk [vmem:[#allocation4] sm:$0xff] %vm120, 0.0
      %123 = vst [vmem:[#allocation5] sm:$0xff] 0.0
    $region37: #{tpu_custom_call.1} parent=1 // pred_fallthru
      _
    %v124 = vld [vmem:[#allocation9] sm:$0xff]
    %v125 = vld [vmem:[#allocation12] sm:$0xff]
    %v126 = vld [vmem:[#allocation12 + $0x8] sm:$0xff]
    %v127 = vld [vmem:[#allocation12 + $0x10] sm:$0xff]
    %v128 = vld [vmem:[#allocation12 + $0x18] sm:$0xff]
    %v129 = vld [vmem:[#allocation12 + $0x20] sm:$0xff]
    %v130 = vld [vmem:[#allocation12 + $0x28] sm:$0xff]
    %v131 = vld [vmem:[#allocation12 + $0x30] sm:$0xff]
    %v132 = vld [vmem:[#allocation12 + $0x38] sm:$0xff]
    %v133 = vld [vmem:[#allocation12 + $0x40] sm:$0xff]
    %v134 = vld [vmem:[#allocation12 + $0x48] sm:$0xff]
    %v135 = vld [vmem:[#allocation12 + $0x50] sm:$0xff]
    %v136 = vld [vmem:[#allocation12 + $0x58] sm:$0xff]
    %v137 = vld [vmem:[#allocation12 + $0x60] sm:$0xff]
    %v138 = vld [vmem:[#allocation12 + $0x68] sm:$0xff]
    %v139 = vld [vmem:[#allocation12 + $0x70] sm:$0xff]
    %v140 = vld [vmem:[#allocation12 + $0x78] sm:$0xff]
    %v141 = vld [vmem:[#allocation12 + $0x80] sm:$0xff]
    %v142 = vld [vmem:[#allocation12 + $0x88] sm:$0xff]
    %v143 = vld [vmem:[#allocation12 + $0x90] sm:$0xff]
    %v144 = vld [vmem:[#allocation12 + $0x98] sm:$0xff]
    %v145 = vld [vmem:[#allocation12 + $0xa0] sm:$0xff]
    %v146 = vld [vmem:[#allocation12 + $0xa8] sm:$0xff]
    %v147 = vld [vmem:[#allocation12 + $0xb0] sm:$0xff]
    %v148 = vld [vmem:[#allocation12 + $0xb8] sm:$0xff]
    %v149 = vld [vmem:[#allocation12 + $0xc0] sm:$0xff]
    %v150 = vld [vmem:[#allocation12 + $0xc8] sm:$0xff]
    %v151 = vld [vmem:[#allocation12 + $0xd0] sm:$0xff]
    %v152 = vld [vmem:[#allocation12 + $0xd8] sm:$0xff]
    %v153 = vld [vmem:[#allocation12 + $0xe0] sm:$0xff]
    %v154 = vld [vmem:[#allocation12 + $0xe8] sm:$0xff]
    %v155 = vld [vmem:[#allocation12 + $0xf0] sm:$0xff]
    %v156 = vld [vmem:[#allocation12 + $0xf8] sm:$0xff]
    %157 = vmatpush.msra.mxu0 %v155
    %158 = vmatpush.msra.mxu0 %v153
    %159 = vmatpush.msra.mxu0 %v151
    %160 = vmatpush.msra.mxu0 %v149
    %161 = vmatpush.msra.mxu0 %v147
    %162 = vmatpush.msra.mxu0 %v145
    %163 = vmatpush.msra.mxu0 %v143
    %164 = vmatpush.msra.mxu0 %v141
    %165 = vmatpush.msra.mxu0 %v139
    %166 = vmatpush.msra.mxu0 %v137
    %167 = vmatpush.msra.mxu0 %v135
    %168 = vmatpush.msra.mxu0 %v133
    %169 = vmatpush.msra.mxu0 %v131
    %170 = vmatpush.msra.mxu0 %v129
    %171 = vmatpush.msra.mxu0 %v127
    %172 = vmatpush.msra.mxu0 %v125
    %173 = vmatmul.f32.gmra.mxu0 %v124
    %v174 = vpop.f32.mrf.mxu0
    %v175 = vadd.f32 0.0, %v174
    %176 = vdwg.mxu0
    %177 = vmatpush.msra.mxu0 %v156
    %178 = vmatpush.msra.mxu0 %v154
    %179 = vmatpush.msra.mxu0 %v152
    %180 = vmatpush.msra.mxu0 %v150
    %181 = vmatpush.msra.mxu0 %v148
    %182 = vmatpush.msra.mxu0 %v146
    %183 = vmatpush.msra.mxu0 %v144
    %184 = vmatpush.msra.mxu0 %v142
    %185 = vmatpush.msra.mxu0 %v140
    %186 = vmatpush.msra.mxu0 %v138
    %187 = vmatpush.msra.mxu0 %v136
    %188 = vmatpush.msra.mxu0 %v134
    %189 = vmatpush.msra.mxu0 %v132
    %190 = vmatpush.msra.mxu0 %v130
    %191 = vmatpush.msra.mxu0 %v128
    %192 = vmatpush.msra.mxu0 %v126
    %193 = vmatmul.f32.gmra.mxu0 %v124
    %v194 = vpop.f32.mrf.mxu0
    %v195 = vadd.f32 0.0, %v194
    %196 = vdwg.mxu0
    %v197 = vld [vmem:[#allocation2] sm:$0xff]
    %198 = vmatpush.xpose.msra.mxu0 0.0
    %199 = vmatpush.xpose.msra.mxu0 0.0
    %200 = vmatpush.xpose.msra.mxu0 0.0
    %201 = vmatpush.xpose.msra.mxu0 0.0
    %202 = vmatpush.xpose.msra.mxu0 0.0
    %203 = vmatpush.xpose.msra.mxu0 0.0
    %204 = vmatpush.xpose.msra.mxu0 0.0
    %205 = vmatpush.xpose.msra.mxu0 0.0
    %206 = vmatpush.xpose.msra.mxu0 0.0
    %207 = vmatpush.xpose.msra.mxu0 0.0
    %208 = vmatpush.xpose.msra.mxu0 0.0
    %209 = vmatpush.xpose.msra.mxu0 0.0
    %210 = vmatpush.xpose.msra.mxu0 0.0
    %211 = vmatpush.xpose.msra.mxu0 0.0
    %212 = vmatpush.xpose.msra.mxu0 0.0
    %213 = vmatpush.xpose.msra.mxu0 %v175
    %214 = vmatmul.f32.gmra.mxu0 %v197
    %v215 = vpop.f32.mrf.mxu0
    %v216 = vadd.f32 0.0, %v215
    %217 = vdwg.mxu0
    %v218 = vld [vmem:[#allocation3] sm:$0xff]
    %vm219 = vcmask 64512
    %v220 = vsel %vm219, %v216, -inf
    %221 = vmax.xlane.f32.xlu0 %v220
    %v222 = vpop.xlane.xlu0 %221
    %v223 = vmax.f32 %v218, %v222
    %v224 = vsub.f32 %v218, %v223
    %v225 = vmul.f32 %v224, 1.442695
    %v226 = vpow.pop %v225
    %228 = vset.pattern.permute.xlu0 0
    %229 = vperm.xlu0 %228, %v223
    %v230 = vpop.permute.xlu0 %229
    %v232 = vsub.f32 %v216, %v230
    %v233 = vmul.f32 %v232, 1.442695
    %v234 = vpow.pop %v233
    %v235 = vld [vmem:[#allocation4] sm:$0xff]
    %v236 = vmul.f32 %v226, %v235
    %v237 = vsel %vm219, %v234, 0.0
    %238 = vadd.xlane.f32.xlu0 %v237
    %v239 = vpop.xlane.xlu0 %238
    %v240 = vadd.f32 %v236, %v239
    %vm241 = vcmask 7168
    %242 = vst.msk [vmem:[#allocation4] sm:$0xff] %vm241, %v240
    %v243 = vld [vmem:[#allocation5] sm:$0xff]
    %245 = vset.pattern.permute.xlu0 0
    %246 = vperm.xlu0 %245, %v226
    %v247 = vpop.permute.xlu0 %246
    %v249 = vmul.f32 %v247, %v243
    %v251 = vsel %vm219, %v234, 0
    %253 = vmatpush.msra.mxu0 0.0
    %254 = vmatpush.msra.mxu0 0.0
    %255 = vmatpush.msra.mxu0 0.0
    %256 = vmatpush.msra.mxu0 0.0
    %257 = vmatpush.msra.mxu0 0.0
    %258 = vmatpush.msra.mxu0 0.0
    %259 = vmatpush.msra.mxu0 0.0
    %260 = vmatpush.msra.mxu0 0.0
    %261 = vmatpush.msra.mxu0 0.0
    %262 = vmatpush.msra.mxu0 0.0
    %263 = vmatpush.msra.mxu0 0.0
    %264 = vmatpush.msra.mxu0 0.0
    %265 = vmatpush.msra.mxu0 0.0
    %266 = vmatpush.msra.mxu0 0.0
    %267 = vmatpush.msra.mxu0 0.0
    %268 = vmatpush.msra.mxu0 %v195
    %269 = vmatmul.f32.gmra.mxu0 %v251
    %v270 = vpop.f32.mrf.mxu0
    %v271 = vadd.f32 0.0, %v270
    %272 = vdwg.mxu0
    %v273 = vadd.f32 %v249, %v271
    %274 = vst [vmem:[#allocation5] sm:$0xff] %v273
    %275 = vst.msk [vmem:[#allocation3] sm:$0xff] %vm241, %v223
    // Predicated region
    $region38: #{tpu_custom_call.1} parent=1 // pred_check
      %p276 = pneg %p77
    $region39: #{tpu_custom_call.1} parent=1 // pred_check_branch
      %278 = sbr.rel (%p276) target = $region41
    $region40: #{tpu_custom_call.1} parent=1 // pred_region
      %v279 = vld [vmem:[#allocation5] sm:$0xff]
      %v280 = vld [vmem:[#allocation4] sm:$0xff]
      %v281 = vrcp.pop %v280
      %283 = vset.pattern.permute.xlu0 0
      %284 = vperm.xlu0 %283, %v281
      %v285 = vpop.permute.xlu0 %284
      %v287 = vmul.f32 %v279, %v285
      %288 = vst [vmem:[#allocation14] sm:$0xff] %v287
    $region41: #{tpu_custom_call.1} parent=1 // pred_fallthru
      _
    // Predicated region
    $region42: #{tpu_custom_call.1} parent=1 // pred_check
      _
    $region43: #{tpu_custom_call.1} parent=1 // pred_check_branch
      %290 = sbr.rel (0) target = $region45
    $region44: #{tpu_custom_call.1} parent=1 // pred_region
      %292 = vsyncadd [#allocation8], 0
      %s294 = sshll.u32 [#allocation14], 4
      %s295 = int_to_ptr.vmem [resolvable:$true] %s294
      %s296 = sshll.u32 %s4, 4
      %s297 = int_to_ptr.hbm [resolvable:$true] %s296
      %299 = dma.vmem_to_hbm [thread:$0]  %s295, 128, %s297, [#allocation8]
    $region45: #{tpu_custom_call.1} parent=1 // pred_fallthru
      _
    // Predicated region
    $region46: #{tpu_custom_call.1} parent=1 // pred_check
      _
    $region47: #{tpu_custom_call.1} parent=1 // pred_check_branch
      %301 = sbr.rel (0) target = $region49
    $region48: #{tpu_custom_call.1} parent=1 // pred_region
      %303 = dma.done [#allocation8], 128
    $region49: #{tpu_custom_call.1} parent=1 // pred_fallthru
      _
    %304 = vsyncpa [#allocation7], 1
    %305 = vsyncpa [#allocation10], 1
    %306 = vsyncpa [#allocation13], 1
    %307 = vsyncpa [#allocation8], 1

</llo_original>
